<compile_context>
chip_gen: v5e
topology: v5e:2x2
jax: 0.10.0
libtpu: 0.0.40
codegen_flags: <defaults>
</compile_context>

<pallas_src>
import jax
import jax.numpy as jnp
from jax.experimental import pallas as pl
from jax.experimental.pallas import tpu as pltpu

INPUT_SIZE = 10
HIDDEN_SIZE = 50
NUM_CLASSES = 1  # layer-2 matvec; kernel is written for a single output class


def mlp_kernel(xt_ref, w1_ref, b1_ref, w2_ref, b2_ref, o_ref):
    # Hoist the small resident parameter reads once per grid step.
    b1 = b1_ref[...]          # (HIDDEN, 1) -> broadcasts over the lane (batch) axis
    b2 = b2_ref[...]          # (1, 1)

    # Layer 1 on the MXU, batch on lanes: (HIDDEN, INPUT) @ (INPUT, TILE_B).
    h = jnp.dot(w1_ref[...], xt_ref[...], preferred_element_type=jnp.float32)
    h = jnp.maximum(h + b1, 0.0)                       # bias + ReLU on the VPU

    # Layer 2 also on the (otherwise idle) MXU: (1, HIDDEN) @ (HIDDEN, TILE_B).
    out = jnp.dot(w2_ref[...], h, preferred_element_type=jnp.float32) + b2
    o_ref[...] = out.astype(o_ref.dtype)               # (1, TILE_B), lane-dense store


def _round_up(v, m):
    return ((v + m - 1) // m) * m


def neural_net_forward(x, w1, b1, w2, b2, *, tile_b=32768, x_is_transposed=False):
    """Forward pass of NeuralNet.

    x:  (B, INPUT_SIZE) float-ish, or (INPUT_SIZE, B) if x_is_transposed=True
        (lane-dense producer path; skips the wrapper transpose copy).
    w1: (HIDDEN_SIZE, INPUT_SIZE)   (PyTorch nn.Linear layout)
    b1: (HIDDEN_SIZE,)
    w2: (NUM_CLASSES, HIDDEN_SIZE)
    b2: (NUM_CLASSES,)
    returns (B, NUM_CLASSES) float32
    """
    assert NUM_CLASSES == 1, "kernel's layer-2 matvec assumes a single output class"

    if x_is_transposed:
        assert x.shape[0] == INPUT_SIZE
        xT = x.astype(jnp.float32)                     # already (INPUT_SIZE, B)
        B = xT.shape[1]
    else:
        assert x.shape[1] == INPUT_SIZE
        B = x.shape[0]
        # Single fused astype+transpose copy (no separate pad pass any more).
        xT = x.astype(jnp.float32).T                   # (INPUT_SIZE, B)

    # ---- tile / grid sizing ------------------------------------------------
    tile_cap = max(128, _round_up(int(tile_b), 128))   # lane-aligned cap
    if B <= 256:
        tile = B                                       # single tile == full array dims
    else:
        # Aim for >= 2 tiles so the "parallel" axis can split across 2 TCs,
        # capped by tile_b (sized against the v7x 64 MiB VMEM budget).
        tile = min(tile_cap, _round_up(pl.cdiv(B, 2), 128))
    num_tiles = pl.cdiv(B, tile)                       # ragged last block handled by Pallas
    grid = (num_tiles,)

    # Parameter shapes the kernel expects.
    w1f = w1.astype(jnp.float32)                                     # (HIDDEN, INPUT)
    b1c = b1.reshape(HIDDEN_SIZE, 1).astype(jnp.float32)             # column -> lane bcast
    w2r = w2.reshape(NUM_CLASSES, HIDDEN_SIZE).astype(jnp.float32)   # PyTorch layout (1, 50)
    b2c = b2.reshape(NUM_CLASSES, 1).astype(jnp.float32)             # (1, 1)

    # Deeper pipelining on the streamed input once the grid is deep enough.
    if num_tiles >= 3:
        x_spec = pl.BlockSpec((INPUT_SIZE, tile), lambda i: (0, i),
                              pipeline_mode=pl.Buffered(3))
    else:
        x_spec = pl.BlockSpec((INPUT_SIZE, tile), lambda i: (0, i))

    out_t = pl.pallas_call(
        mlp_kernel,
        out_shape=jax.ShapeDtypeStruct((NUM_CLASSES, B), jnp.float32),
        grid_spec=pl.GridSpec(
            grid=grid,
            in_specs=[
                x_spec,                                                        # x^T tile (streamed)
                pl.BlockSpec((HIDDEN_SIZE, INPUT_SIZE), lambda i: (0, 0)),     # W1 (VMEM-resident)
                pl.BlockSpec((HIDDEN_SIZE, 1), lambda i: (0, 0)),              # b1 column
                pl.BlockSpec((NUM_CLASSES, HIDDEN_SIZE), lambda i: (0, 0)),    # W2 row (1, 50)
                pl.BlockSpec((NUM_CLASSES, 1), lambda i: (0, 0)),              # b2
            ],
            out_specs=pl.BlockSpec((NUM_CLASSES, tile), lambda i: (0, i)),     # lane-dense out
        ),
        compiler_params=pltpu.CompilerParams(
            dimension_semantics=("parallel",),
            vmem_limit_bytes=48 * 1024 * 1024,
        ),
        cost_estimate=pl.CostEstimate(
            flops=2 * B * INPUT_SIZE * HIDDEN_SIZE
                  + 2 * B * HIDDEN_SIZE * NUM_CLASSES,
            transcendentals=0,
            bytes_accessed=4 * (B * INPUT_SIZE + B * NUM_CLASSES
                                + HIDDEN_SIZE * INPUT_SIZE + HIDDEN_SIZE
                                + NUM_CLASSES * HIDDEN_SIZE + NUM_CLASSES),
        ),
    )(xT, w1f, b1c, w2r, b2c)

    # (NUM_CLASSES, B) -> (B, NUM_CLASSES); trivial layout plumbing in XLA.
    return out_t.T


def init_params(key):
    # nn.Linear-style uniform(-1/sqrt(fan_in), 1/sqrt(fan_in)), PyTorch layouts.
    k1, k2, k3, k4 = jax.random.split(key, 4)
    bound1 = 1.0 / (INPUT_SIZE ** 0.5)
    bound2 = 1.0 / (HIDDEN_SIZE ** 0.5)
    w1 = jax.random.uniform(k1, (HIDDEN_SIZE, INPUT_SIZE), jnp.float32,
                            minval=-bound1, maxval=bound1)
    b1 = jax.random.uniform(k2, (HIDDEN_SIZE,), jnp.float32,
                            minval=-bound1, maxval=bound1)
    w2 = jax.random.uniform(k3, (NUM_CLASSES, HIDDEN_SIZE), jnp.float32,
                            minval=-bound2, maxval=bound2)
    b2 = jax.random.uniform(k4, (NUM_CLASSES,), jnp.float32,
                            minval=-bound2, maxval=bound2)
    return w1, b1, w2, b2


def reference_forward(x, w1, b1, w2, b2):
    # Pure-JAX reference with the exact PyTorch semantics.
    return jnp.maximum(x @ w1.T + b1, 0.0) @ w2.T + b2


if __name__ == "__main__":
    key = jax.random.PRNGKey(0)
    k_x1, k_x2, k_p = jax.random.split(key, 3)
    w1, b1, w2, b2 = init_params(k_p)

    # Small case (B = 8): single tile, block dims equal the full array dims.
    x_small = jax.random.normal(k_x1, (8, INPUT_SIZE), jnp.float32)
    out_small = jax.block_until_ready(neural_net_forward(x_small, w1, b1, w2, b2))
    ref_small = reference_forward(x_small, w1, b1, w2, b2)
    assert out_small.shape == (8, NUM_CLASSES)
    assert jnp.allclose(out_small, ref_small, atol=1e-5, rtol=1e-5)

    # Larger case exercising the multi-tile parallel grid, the ragged last
    # block (no explicit padding) and Buffered(3) on x:
    # B = 300, tile = 128 -> 3 grid steps, last block only 44 columns wide.
    x_big = jax.random.normal(k_x2, (300, INPUT_SIZE), jnp.float32)
    out_big = jax.block_until_ready(
        neural_net_forward(x_big, w1, b1, w2, b2, tile_b=128))
    ref_big = reference_forward(x_big, w1, b1, w2, b2)
    assert out_big.shape == (300, NUM_CLASSES)
    assert jnp.allclose(out_big, ref_big, atol=1e-5, rtol=1e-5)

    # Lane-dense producer path: x already (INPUT_SIZE, B), no wrapper copy.
    out_td = jax.block_until_ready(
        neural_net_forward(x_big.T, w1, b1, w2, b2, tile_b=128,
                           x_is_transposed=True))
    assert out_td.shape == (300, NUM_CLASSES)
    assert jnp.allclose(out_td, ref_big, atol=1e-5, rtol=1e-5)

    print("KERNEL_OK")
</pallas_src>

<mosaic_0001>
module attributes {stable_mosaic.version = 11 : i64} {
  func.func @mlp_kernel(%arg0: i32, %arg1: memref<10x8xf32, #tpu.memory_space<vmem>>, %arg2: memref<50x10xf32, #tpu.memory_space<vmem>>, %arg3: memref<50x1xf32, #tpu.memory_space<vmem>>, %arg4: memref<1x50xf32, #tpu.memory_space<vmem>>, %arg5: memref<1x1xf32, #tpu.memory_space<vmem>>, %arg6: memref<1x8xf32, #tpu.memory_space<vmem>>) attributes {dimension_semantics = [#tpu.dimension_semantics<parallel>], iteration_bounds = array<i64: 1>, scalar_prefetch = 0 : i64, scratch_operands = 0 : i64, tpu.core_type = #tpu.core_type<tc>, window_params = [{transform_indices = @transform_0, window_bounds = array<i64: 10, 8>}, {pipeline_mode = #tpu.pipeline_mode<synchronous>, transform_indices = @transform_1, window_bounds = array<i64: 50, 10>}, {pipeline_mode = #tpu.pipeline_mode<synchronous>, transform_indices = @transform_2, window_bounds = array<i64: 50, 1>}, {pipeline_mode = #tpu.pipeline_mode<synchronous>, transform_indices = @transform_3, window_bounds = array<i64: 1, 50>}, {pipeline_mode = #tpu.pipeline_mode<synchronous>, transform_indices = @transform_4, window_bounds = array<i64: 1, 1>}, {transform_indices = @transform_5, window_bounds = array<i64: 1, 8>}]} {
    %c0 = arith.constant 0 : index
    %c0_0 = arith.constant 0 : index
    %0 = vector.load %arg3[%c0, %c0_0] : memref<50x1xf32, #tpu.memory_space<vmem>>, vector<50x1xf32>
    %c0_1 = arith.constant 0 : index
    %c0_2 = arith.constant 0 : index
    %1 = vector.load %arg5[%c0_1, %c0_2] : memref<1x1xf32, #tpu.memory_space<vmem>>, vector<1x1xf32>
    %c0_3 = arith.constant 0 : index
    %c0_4 = arith.constant 0 : index
    %2 = vector.load %arg2[%c0_3, %c0_4] : memref<50x10xf32, #tpu.memory_space<vmem>>, vector<50x10xf32>
    %c0_5 = arith.constant 0 : index
    %c0_6 = arith.constant 0 : index
    %3 = vector.load %arg1[%c0_5, %c0_6] : memref<10x8xf32, #tpu.memory_space<vmem>>, vector<10x8xf32>
    %cst = arith.constant dense<0.000000e+00> : vector<50x8xf32>
    %4 = tpu.matmul %2, %3, %cst {dimension_numbers = #tpu.dot_dimension_numbers<[1], [0], [0], [1], [0, 0, 1, 1], [], []>} : vector<50x10xf32>, vector<10x8xf32>, vector<50x8xf32> -> vector<50x8xf32>
    %5 = vector.broadcast %0 : vector<50x1xf32> to vector<50x8xf32>
    %6 = arith.addf %4, %5 : vector<50x8xf32>
    %cst_7 = arith.constant 0.000000e+00 : f32
    %7 = vector.broadcast %cst_7 : f32 to vector<50x8xf32>
    %8 = arith.maximumf %6, %7 : vector<50x8xf32>
    %c0_8 = arith.constant 0 : index
    %c0_9 = arith.constant 0 : index
    %9 = vector.load %arg4[%c0_8, %c0_9] : memref<1x50xf32, #tpu.memory_space<vmem>>, vector<1x50xf32>
    %cst_10 = arith.constant dense<0.000000e+00> : vector<1x8xf32>
    %10 = tpu.matmul %9, %8, %cst_10 {dimension_numbers = #tpu.dot_dimension_numbers<[1], [0], [0], [1], [0, 0, 1, 1], [], []>} : vector<1x50xf32>, vector<50x8xf32>, vector<1x8xf32> -> vector<1x8xf32>
    %11 = vector.broadcast %1 : vector<1x1xf32> to vector<1x8xf32>
    %12 = arith.addf %10, %11 : vector<1x8xf32>
    %c0_11 = arith.constant 0 : index
    %c0_12 = arith.constant 0 : index
    %13 = vector.load %arg6[%c0_11, %c0_12] : memref<1x8xf32, #tpu.memory_space<vmem>>, vector<1x8xf32>
    tpu.vector_store %arg6[%c0_11, %c0_12], %12 {strides = array<i32>} : memref<1x8xf32, #tpu.memory_space<vmem>>, vector<1x8xf32>,
    return
  }
  func.func @transform_0(%arg0: i32) -> (i32, i32) {
    %c0_i32 = arith.constant 0 : i32
    %c0_i32_0 = arith.constant 0 : i32
    return %c0_i32, %arg0 : i32, i32
  }
  func.func @transform_1(%arg0: i32) -> (i32, i32) {
    %c0_i32 = arith.constant 0 : i32
    %c0_i32_0 = arith.constant 0 : i32
    %c0_i32_1 = arith.constant 0 : i32
    return %c0_i32, %c0_i32_0 : i32, i32
  }
  func.func @transform_2(%arg0: i32) -> (i32, i32) {
    %c0_i32 = arith.constant 0 : i32
    %c0_i32_0 = arith.constant 0 : i32
    %c0_i32_1 = arith.constant 0 : i32
    return %c0_i32, %c0_i32_0 : i32, i32
  }
  func.func @transform_3(%arg0: i32) -> (i32, i32) {
    %c0_i32 = arith.constant 0 : i32
    %c0_i32_0 = arith.constant 0 : i32
    %c0_i32_1 = arith.constant 0 : i32
    return %c0_i32, %c0_i32_0 : i32, i32
  }
  func.func @transform_4(%arg0: i32) -> (i32, i32) {
    %c0_i32 = arith.constant 0 : i32
    %c0_i32_0 = arith.constant 0 : i32
    %c0_i32_1 = arith.constant 0 : i32
    return %c0_i32, %c0_i32_0 : i32, i32
  }
  func.func @transform_5(%arg0: i32) -> (i32, i32) {
    %c0_i32 = arith.constant 0 : i32
    %c0_i32_0 = arith.constant 0 : i32
    return %c0_i32, %arg0 : i32, i32
  }
}

</mosaic_0001>

<llo_original>
// kernel: tpu_custom_call.1
$region0: #{tpu_custom_call.1}
  #allocation0 [shape = 'u32[]', space=smem, size = 0x4, offset = 0x4, fixed_abs, tag = 'smem constant byte address 0x4 - core index']
  #allocation1 [shape = 'u32[72,128]{1,0:T(1,128)}', space=vmem, size = 0x9000, scoped, tag = 'internal scratch']
  #allocation2 [shape = 'f32[1,1]{1,0:T(1,128)S(1)}', space=vmem, size = 0x200, scoped, tag = 'scoped memory for tpu_custom_call.1']
  %s0 = inlined_call_operand.vmem [shape: f32[10,8], index: 0, kind: input, shape index: {}]
  %s1 = inlined_call_operand.vmem [shape: f32[50,10], index: 1, kind: input, shape index: {}]
  %s2 = inlined_call_operand.vmem [shape: f32[50,1], index: 2, kind: input, shape index: {}]
  %s3 = inlined_call_operand.vmem [shape: f32[1,50], index: 3, kind: input, shape index: {}]
  %s4 = inlined_call_operand.<no memory space> [shape: f32[1,1], index: 4, kind: input, shape index: {}]
  %s5 = inlined_call_operand.hbm [shape: f32[1,8], index: 5, kind: output, shape index: {}]
  %s6 = sld [smem:[#allocation0]]
  $region30: #{tpu_custom_call.1} parent=0
    _
  %s8 = ssub.s32 1, %s6
  %s9 = scalar_select 0, %s8, %s6
  %v10 = vstv %s4
  %11 = vst [vmem:[#allocation2] sm:$0x1] %v10
  $region1: #{tpu_custom_call.1} parent=0
    #allocation3 [shape = 'u8[512]{0}', space=vmem, size = 0x400, scoped, tag = 'output window, operand 0, single buffered']
    #allocation4 [shape = 's32[1]{0}', space=sflag, size = 0x4, scoped, tag = 'scoped memory for tpu_custom_call.1']
    %12 = vsyncpa [#allocation4], 0
    // Predicated region
    $region2: #{tpu_custom_call.1} parent=1 // pred_check
      _
    $region3: #{tpu_custom_call.1} parent=1 // pred_check_branch
      %14 = sbr.rel (0) target = $region5
    $region4: #{tpu_custom_call.1} parent=1 // pred_region
      _
    $region5: #{tpu_custom_call.1} parent=1 // pred_fallthru
      _
    // Predicated region
    $region6: #{tpu_custom_call.1} parent=1 // pred_check
      _
    $region7: #{tpu_custom_call.1} parent=1 // pred_check_branch
      %16 = sbr.rel (0) target = $region9
    $region8: #{tpu_custom_call.1} parent=1 // pred_region
      _
    $region9: #{tpu_custom_call.1} parent=1 // pred_fallthru
      _
    // Predicated region
    $region10: #{tpu_custom_call.1} parent=1 // pred_check
      _
    $region11: #{tpu_custom_call.1} parent=1 // pred_check_branch
      %18 = sbr.rel (0) target = $region13
    $region12: #{tpu_custom_call.1} parent=1 // pred_region
      _
    $region13: #{tpu_custom_call.1} parent=1 // pred_fallthru
      _
    // Predicated region
    $region14: #{tpu_custom_call.1} parent=1 // pred_check
      _
    $region15: #{tpu_custom_call.1} parent=1 // pred_check_branch
      %20 = sbr.rel (0) target = $region17
    $region16: #{tpu_custom_call.1} parent=1 // pred_region
      _
    $region17: #{tpu_custom_call.1} parent=1 // pred_fallthru
      _
    // Predicated region
    $region18: #{tpu_custom_call.1} parent=1 // pred_check
      _
    $region19: #{tpu_custom_call.1} parent=1 // pred_check_branch
      %22 = sbr.rel (0) target = $region21
    $region20: #{tpu_custom_call.1} parent=1 // pred_region
      _
    $region21: #{tpu_custom_call.1} parent=1 // pred_fallthru
      _
    %v23 = vld [vmem:[%s2] sm:$0xff]
    %v24 = vld [vmem:[%s2 + $0x8] sm:$0xff]
    %v25 = vld [vmem:[%s2 + $0x10] sm:$0xff]
    %v26 = vld [vmem:[%s2 + $0x18] sm:$0xff]
    %v27 = vld [vmem:[%s2 + $0x20] sm:$0xff]
    %v28 = vld [vmem:[%s2 + $0x28] sm:$0xff]
    %v29 = vld [vmem:[%s2 + $0x30] sm:$0x3]
    %v30 = vld [vmem:[#allocation2] sm:$0x1]
    %v31 = vld [vmem:[%s1] sm:$0xff]
    %v32 = vld [vmem:[%s1 + $0x8] sm:$0xff]
    %v33 = vld [vmem:[%s1 + $0x10] sm:$0xff]
    %v34 = vld [vmem:[%s1 + $0x18] sm:$0xff]
    %v35 = vld [vmem:[%s1 + $0x20] sm:$0xff]
    %v36 = vld [vmem:[%s1 + $0x28] sm:$0xff]
    %v37 = vld [vmem:[%s1 + $0x30] sm:$0x3]
    %v38 = vld [vmem:[%s0] sm:$0xff]
    %v39 = vld [vmem:[%s0 + $0x8] sm:$0x3]
    %41 = vset.pattern.permute.xlu0 0
    %42 = vperm.xlu0 %41, %v23
    %v43 = vpop.permute.xlu0 %42
    %46 = vset.pattern.permute.xlu0 0
    %47 = vperm.xlu0 %46, %v24
    %v48 = vpop.permute.xlu0 %47
    %51 = vset.pattern.permute.xlu0 0
    %52 = vperm.xlu0 %51, %v25
    %v53 = vpop.permute.xlu0 %52
    %56 = vset.pattern.permute.xlu0 0
    %57 = vperm.xlu0 %56, %v26
    %v58 = vpop.permute.xlu0 %57
    %61 = vset.pattern.permute.xlu0 0
    %62 = vperm.xlu0 %61, %v27
    %v63 = vpop.permute.xlu0 %62
    %66 = vset.pattern.permute.xlu0 0
    %67 = vperm.xlu0 %66, %v28
    %v68 = vpop.permute.xlu0 %67
    %71 = vset.pattern.permute.xlu0 0
    %72 = vperm.xlu0 %71, %v29
    %v73 = vpop.permute.xlu0 %72
    %vm75 = vcmask 80896
    %v77 = vsel %vm75, %v31, 0
    %v80 = vsel %vm75, %v32, 0
    %v83 = vsel %vm75, %v33, 0
    %v86 = vsel %vm75, %v34, 0
    %v89 = vsel %vm75, %v35, 0
    %v92 = vsel %vm75, %v36, 0
    %v95 = vsel %vm75, %v37, 0
    %vm97 = vcmask 1041408
    %v99 = vsel %vm97, %v39, 0
    %101 = vmatpush.msra.mxu0 0.0
    %102 = vmatpush.msra.mxu0 0.0
    %103 = vmatpush.msra.mxu0 0.0
    %104 = vmatpush.msra.mxu0 0.0
    %105 = vmatpush.msra.mxu0 0.0
    %106 = vmatpush.msra.mxu0 0.0
    %107 = vmatpush.msra.mxu0 0.0
    %108 = vmatpush.msra.mxu0 0.0
    %109 = vmatpush.msra.mxu0 0.0
    %110 = vmatpush.msra.mxu0 0.0
    %111 = vmatpush.msra.mxu0 0.0
    %112 = vmatpush.msra.mxu0 0.0
    %113 = vmatpush.msra.mxu0 0.0
    %114 = vmatpush.msra.mxu0 0.0
    %115 = vmatpush.msra.mxu0 %v99
    %116 = vmatpush.msra.mxu0 %v38
    %117 = vmatmul.f32.gmra.mxu0 %v77
    %v118 = vpop.f32.mrf.mxu0
    %v119 = vadd.f32 %v43, %v118
    %120 = vmatmul.f32.gmra.mxu0 %v80
    %v121 = vpop.f32.mrf.mxu0
    %v122 = vadd.f32 %v48, %v121
    %123 = vmatmul.f32.gmra.mxu0 %v83
    %v124 = vpop.f32.mrf.mxu0
    %v125 = vadd.f32 %v53, %v124
    %126 = vmatmul.f32.gmra.mxu0 %v86
    %v127 = vpop.f32.mrf.mxu0
    %v128 = vadd.f32 %v58, %v127
    %129 = vmatmul.f32.gmra.mxu0 %v89
    %v130 = vpop.f32.mrf.mxu0
    %v131 = vadd.f32 %v63, %v130
    %132 = vmatmul.f32.gmra.mxu0 %v92
    %v133 = vpop.f32.mrf.mxu0
    %v134 = vadd.f32 %v68, %v133
    %135 = vmatmul.f32.gmra.mxu0 %v95
    %v136 = vpop.f32.mrf.mxu0
    %v137 = vadd.f32 %v73, %v136
    %138 = vdwg.mxu0
    %v139 = vmax.f32 %v119, 0.0
    %v140 = vmax.f32 %v122, 0.0
    %v141 = vmax.f32 %v125, 0.0
    %v142 = vmax.f32 %v128, 0.0
    %v143 = vmax.f32 %v131, 0.0
    %v144 = vmax.f32 %v134, 0.0
    %v145 = vmax.f32 %v137, 0.0
    %v146 = vld [vmem:[%s3] sm:$0x1]
    %148 = vset.pattern.permute.xlu0 0
    %149 = vperm.xlu0 %148, %v30
    %v150 = vpop.permute.xlu0 %149
    %v152 = vperm.slane %v150, 0
    %vm153 = vcmask 408576
    %v155 = vsel %vm153, %v146, 0
    %v158 = vsel %vm97, %v145, 0
    %160 = vmatpush.msra.mxu0 0.0
    %161 = vmatpush.msra.mxu0 0.0
    %162 = vmatpush.msra.mxu0 0.0
    %163 = vmatpush.msra.mxu0 0.0
    %164 = vmatpush.msra.mxu0 0.0
    %165 = vmatpush.msra.mxu0 0.0
    %166 = vmatpush.msra.mxu0 0.0
    %167 = vmatpush.msra.mxu0 0.0
    %168 = vmatpush.msra.mxu0 0.0
    %169 = vmatpush.msra.mxu0 %v158
    %170 = vmatpush.msra.mxu0 %v144
    %171 = vmatpush.msra.mxu0 %v143
    %172 = vmatpush.msra.mxu0 %v142
    %173 = vmatpush.msra.mxu0 %v141
    %174 = vmatpush.msra.mxu0 %v140
    %175 = vmatpush.msra.mxu0 %v139
    %176 = vmatmul.f32.gmra.mxu0 %v155
    %v177 = vpop.f32.mrf.mxu0
    %v178 = vadd.f32 %v152, %v177
    %179 = vdwg.mxu0
    %vm180 = vcmask 57344
    %181 = vst.msk [vmem:[#allocation3] sm:$0x1] %vm180, %v178
    // Predicated region
    $region22: #{tpu_custom_call.1} parent=1 // pred_check
      _
    $region23: #{tpu_custom_call.1} parent=1 // pred_check_branch
      %183 = sbr.rel (0) target = $region25
    $region24: #{tpu_custom_call.1} parent=1 // pred_region
      %185 = vsyncadd [#allocation4], 0
      %s187 = sshll.u32 [#allocation3], 4
      %s188 = int_to_ptr.vmem [resolvable:$true] %s187
      %s189 = sshll.u32 %s5, 4
      %s190 = int_to_ptr.hbm [resolvable:$true] %s189
      %192 = dma.vmem_to_hbm [thread:$0]  %s188, 16, %s190, [#allocation4]
    $region25: #{tpu_custom_call.1} parent=1 // pred_fallthru
      _
    // Predicated region
    $region26: #{tpu_custom_call.1} parent=1 // pred_check
      _
    $region27: #{tpu_custom_call.1} parent=1 // pred_check_branch
      %194 = sbr.rel (0) target = $region29
    $region28: #{tpu_custom_call.1} parent=1 // pred_region
      %196 = dma.done [#allocation4], 16
    $region29: #{tpu_custom_call.1} parent=1 // pred_fallthru
      _
    %197 = vsyncpa [#allocation4], 1

</llo_original>
